<compile_context>
chip_gen: v5e
topology: v5e:2x2
jax: 0.10.0
libtpu: 0.0.40
codegen_flags: <defaults>
</compile_context>

<pallas_src>
import jax
import jax.numpy as jnp
from jax import lax
from jax.experimental import pallas as pl
from jax.experimental.pallas import tpu as pltpu

_F_NORMALIZE_EPS = 1e-12  # torch.nn.functional.normalize default eps


def _round_up(x: int, m: int) -> int:
    return ((x + m - 1) // m) * m


def _round_down(x: int, m: int) -> int:
    return (x // m) * m


def _cdiv(a: int, b: int) -> int:
    return (a + b - 1) // b


def _make_kernel(*, n1, n2, tile1, tile2, tiles1, tiles2, inner, mm_dtype):
    eps_sq = _F_NORMALIZE_EPS * _F_NORMALIZE_EPS

    def kernel(m1_ref, m2_ref, g1_ref, g2_ref):
        c = pl.program_id(0)          # parallel chunk (TensorCore on v7x)
        j = pl.program_id(1)          # row-tile step within the chunk
        t = c * inner + j             # global row-tile index

        @pl.when(j == 0)
        def _init():
            g1_ref[...] = jnp.zeros_like(g1_ref)
            g2_ref[...] = jnp.zeros_like(g2_ref)

        def _accumulate(m_ref, g_ref, tile_rows, n_rows):
            m = m_ref[...].astype(jnp.float32)
            # Boundary blocks may contain garbage past the last real row:
            # mask them out before any arithmetic (replaces wrapper-side pad).
            row_ids = t * tile_rows + lax.broadcasted_iota(
                jnp.int32, (tile_rows, 1), dimension=0)
            m = jnp.where(row_ids < n_rows, m, 0.0)
            # torch: x / max(||x||, eps)  ==  x * rsqrt(max(ss, eps^2))   (EUP)
            ss = jnp.sum(m * m, axis=-1, keepdims=True)
            mn = (m * lax.rsqrt(jnp.maximum(ss, eps_sq))).astype(mm_dtype)
            # Gram update G += M^T M, contracting the row axis (no transpose).
            dn = (((0,), (0,)), ((), ()))
            g_ref[...] += lax.dot_general(mn, mn, dn,
                                          preferred_element_type=jnp.float32)

        @pl.when(t < tiles1)
        def _acc1():
            _accumulate(m1_ref, g1_ref, tile1, n1)

        @pl.when(t < tiles2)
        def _acc2():
            _accumulate(m2_ref, g2_ref, tile2, n2)

    return kernel


def memory_loss(memory1: jax.Array, memory2: jax.Array, *,
                target_block_bytes: int = 2 << 20,
                matmul_dtype=None) -> jax.Array:
    """Pallas implementation of MemoryLoss.forward."""
    assert memory1.ndim == 2 and memory2.ndim == 2
    assert memory1.shape[1] == memory2.shape[1]
    n1, d = memory1.shape
    n2 = memory2.shape[0]
    assert n1 > 0 and n2 > 0

    d_pad = _round_up(d, 128)

    def _prep(m):
        # Pad features only when D is not lane-aligned; pad rows only when the
        # matrix has fewer than one sublane group (8 rows).  No other padding:
        # ragged row tiles are masked inside the kernel.
        row_pad = max(0, 8 - m.shape[0])
        col_pad = d_pad - d
        if row_pad or col_pad:
            m = jnp.pad(m, ((0, row_pad), (0, col_pad)))
        return m

    m1 = _prep(memory1)
    m2 = _prep(memory2)
    rows1, rows2 = m1.shape[0], m2.shape[0]
    isz1 = jnp.dtype(m1.dtype).itemsize
    isz2 = jnp.dtype(m2.dtype).itemsize

    if matmul_dtype is None:
        mm_dtype = jnp.bfloat16 if memory1.dtype == jnp.bfloat16 else jnp.float32
    else:
        mm_dtype = matmul_dtype

    # ---- VMEM budget: hardware-derived cap (v7x has only 64 MiB physical). ----
    try:
        vmem_cap = int(pltpu.get_tpu_info().vmem_capacity_bytes)
    except Exception:
        vmem_cap = 64 << 20
    vmem_cap = (vmem_cap * 85) // 100          # ~15% headroom

    out_bytes = 2 * 2 * d_pad * d_pad * 4      # 2 Gram outputs x 2 buffers, f32
    slack = 2 << 20
    input_budget = vmem_cap - out_bytes - slack
    # Per-row VMEM cost of one input tile: 3 pipeline buffers + ~3 f32 temporaries.
    row_bytes1 = (3 * isz1 + 3 * 4) * d_pad
    row_bytes2 = (3 * isz2 + 3 * 4) * d_pad
    # TODO(synk): tile the D x D Gram accumulation (block over d_i, d_j) for very
    # large feature dims instead of asserting here.
    assert input_budget >= 8 * (row_bytes1 + row_bytes2), (
        f"feature dim {d} (padded {d_pad}) too large for the untiled Gram accumulator")

    def _pick_tile(rows, itemsize, row_bytes):
        sublane = 8 if itemsize >= 4 else (16 if itemsize == 2 else 32)
        cap_rows = (input_budget // 2) // row_bytes
        want_rows = max(target_block_bytes // (d_pad * itemsize), 8)
        tile = min(want_rows, cap_rows, max(_round_down(rows, 8), 8))
        tile = max(_round_down(tile, sublane), 8)
        return tile

    tile1 = _pick_tile(rows1, isz1, row_bytes1)
    tile2 = _pick_tile(rows2, isz2, row_bytes2)
    tiles1 = _cdiv(rows1, tile1)
    tiles2 = _cdiv(rows2, tile2)
    tiles_max = max(tiles1, tiles2)

    # Leading "parallel" axis: splits the row-tile range across TensorCores on
    # v7x (2 TCs); it is just a cheap serial outer loop on v5e/v6e.
    num_chunks = 2 if tiles_max >= 2 else 1
    inner = _cdiv(tiles_max, num_chunks)

    vmem_needed = (tile1 * row_bytes1 + tile2 * row_bytes2 + out_bytes + slack)
    vmem_limit = int(min(max(vmem_needed, 16 << 20), vmem_cap))

    def _in_spec(tile, tiles):
        def index_map(c, j, _tiles=tiles):
            # Clamp so the shorter input never indexes out of range; when the
            # block index repeats the re-fetch is elided (no wasted HBM reads).
            return (jnp.minimum(c * inner + j, _tiles - 1), 0)
        if inner >= 3:
            try:
                return pl.BlockSpec((tile, d_pad), index_map,
                                    pipeline_mode=pl.Buffered(3))
            except TypeError:
                pass
        return pl.BlockSpec((tile, d_pad), index_map)

    out_spec = pl.BlockSpec((d_pad, d_pad), lambda c, j: (c, 0))

    rows_eff = tiles1 * tile1 + tiles2 * tile2
    cost = pl.CostEstimate(
        flops=int(2 * d_pad * d_pad * rows_eff),        # two Gram matmul streams
        transcendentals=int(rows_eff),                  # one rsqrt per row
        bytes_accessed=int(rows1 * d_pad * isz1 + rows2 * d_pad * isz2
                           + 2 * num_chunks * d_pad * d_pad * 4),
    )

    kernel = _make_kernel(n1=n1, n2=n2, tile1=tile1, tile2=tile2,
                          tiles1=tiles1, tiles2=tiles2, inner=inner,
                          mm_dtype=mm_dtype)

    g1_parts, g2_parts = pl.pallas_call(
        kernel,
        out_shape=(
            jax.ShapeDtypeStruct((num_chunks * d_pad, d_pad), jnp.float32),
            jax.ShapeDtypeStruct((num_chunks * d_pad, d_pad), jnp.float32),
        ),
        grid_spec=pltpu.PrefetchScalarGridSpec(
            num_scalar_prefetch=0,
            grid=(num_chunks, inner),
            in_specs=[_in_spec(tile1, tiles1), _in_spec(tile2, tiles2)],
            out_specs=(out_spec, out_spec),
        ),
        compiler_params=pltpu.CompilerParams(
            dimension_semantics=("parallel", "arbitrary"),
            vmem_limit_bytes=vmem_limit,
        ),
        cost_estimate=cost,
    )(m1, m2)

    # Tiny wrapper-side finalize: <sum_c G1_c, sum_c G2_c>_F, then sqrt.
    g1 = g1_parts.reshape(num_chunks, d_pad, d_pad).sum(axis=0)
    g2 = g2_parts.reshape(num_chunks, d_pad, d_pad).sum(axis=0)
    fro_sq = jnp.sum(g1 * g2)

    # loss = ||m1n @ m2n.T||_F / int(N1 ** 0.5)  (truncation matches
    # int(Decimal(dot_size ** 0.5)) in the reference; static Python int).
    divisor = int(n1 ** 0.5)
    return jnp.sqrt(fro_sq) / divisor


def _reference(memory1, memory2):
    m1 = memory1 / jnp.maximum(
        jnp.linalg.norm(memory1.astype(jnp.float32), axis=1, keepdims=True),
        _F_NORMALIZE_EPS)
    m2 = memory2 / jnp.maximum(
        jnp.linalg.norm(memory2.astype(jnp.float32), axis=1, keepdims=True),
        _F_NORMALIZE_EPS)
    dp = m1 @ m2.T
    return jnp.linalg.norm(dp) / int(memory1.shape[0] ** 0.5)


if __name__ == "__main__":
    key = jax.random.PRNGKey(0)
    k1, k2, k3, k4 = jax.random.split(key, 4)

    # Small shapes consistent with the module: two memory banks [N, D].
    N, D = 8, 32
    memory1 = jax.random.normal(k1, (N, D), dtype=jnp.float32)
    memory2 = jax.random.normal(k2, (N, D), dtype=jnp.float32)

    loss = jax.block_until_ready(memory_loss(memory1, memory2))
    ref = jax.block_until_ready(_reference(memory1, memory2))
    assert jnp.allclose(loss, ref, rtol=1e-4, atol=1e-5), (loss, ref)

    # Second case: unequal row counts, non-lane-aligned D, ragged last tile,
    # 2-chunk parallel grid.
    m1b = jax.random.normal(k3, (520, 40), dtype=jnp.float32)
    m2b = jax.random.normal(k4, (300, 40), dtype=jnp.float32)
    loss_b = jax.block_until_ready(memory_loss(m1b, m2b))
    ref_b = jax.block_until_ready(_reference(m1b, m2b))
    assert jnp.allclose(loss_b, ref_b, rtol=1e-4, atol=1e-5), (loss_b, ref_b)

    print("KERNEL_OK")
</pallas_src>

<mosaic_0001>
module attributes {stable_mosaic.version = 11 : i64} {
  func.func @kernel(%arg0: i32, %arg1: i32, %arg2: memref<8x128xf32, #tpu.memory_space<vmem>>, %arg3: memref<8x128xf32, #tpu.memory_space<vmem>>, %arg4: memref<128x128xf32, #tpu.memory_space<vmem>>, %arg5: memref<128x128xf32, #tpu.memory_space<vmem>>) attributes {dimension_semantics = [#tpu.dimension_semantics<parallel>, #tpu.dimension_semantics<arbitrary>], iteration_bounds = array<i64: 1, 1>, scalar_prefetch = 0 : i64, scratch_operands = 0 : i64, tpu.core_type = #tpu.core_type<tc>, window_params = [{transform_indices = @transform_0, window_bounds = array<i64: 8, 128>}, {transform_indices = @transform_1, window_bounds = array<i64: 8, 128>}, {transform_indices = @transform_2, window_bounds = array<i64: 128, 128>}, {transform_indices = @transform_3, window_bounds = array<i64: 128, 128>}]} {
    %c1_i32 = arith.constant 1 : i32
    %0 = arith.muli %arg0, %c1_i32 : i32
    %1 = arith.addi %0, %arg1 : i32
    %c0_i32 = arith.constant 0 : i32
    %2 = arith.cmpi eq, %arg1, %c0_i32 : i32
    %3 = arith.extui %2 : i1 to i32
    %c0_i32_0 = arith.constant 0 : i32
    %4 = arith.cmpi ne, %3, %c0_i32_0 : i32
    scf.if %4 {
      %cst = arith.constant 0.000000e+00 : f32
      %11 = vector.broadcast %cst : f32 to vector<128x128xf32>
      %c0 = arith.constant 0 : index
      %c0_5 = arith.constant 0 : index
      %12 = vector.load %arg4[%c0, %c0_5] : memref<128x128xf32, #tpu.memory_space<vmem>>, vector<128x128xf32>
      tpu.vector_store %arg4[%c0, %c0_5], %11 {strides = array<i32>} : memref<128x128xf32, #tpu.memory_space<vmem>>, vector<128x128xf32>,
      %cst_6 = arith.constant 0.000000e+00 : f32
      %13 = vector.broadcast %cst_6 : f32 to vector<128x128xf32>
      %c0_7 = arith.constant 0 : index
      %c0_8 = arith.constant 0 : index
      %14 = vector.load %arg5[%c0_7, %c0_8] : memref<128x128xf32, #tpu.memory_space<vmem>>, vector<128x128xf32>
      tpu.vector_store %arg5[%c0_7, %c0_8], %13 {strides = array<i32>} : memref<128x128xf32, #tpu.memory_space<vmem>>, vector<128x128xf32>,
    } else {
    }
    %c1_i32_1 = arith.constant 1 : i32
    %5 = arith.cmpi slt, %1, %c1_i32_1 : i32
    %6 = arith.extui %5 : i1 to i32
    %c0_i32_2 = arith.constant 0 : i32
    %7 = arith.cmpi ne, %6, %c0_i32_2 : i32
    scf.if %7 {
      %c0 = arith.constant 0 : index
      %c0_5 = arith.constant 0 : index
      %11 = vector.load %arg2[%c0, %c0_5] : memref<8x128xf32, #tpu.memory_space<vmem>>, vector<8x128xf32>
      %c8_i32 = arith.constant 8 : i32
      %12 = arith.muli %1, %c8_i32 : i32
      %13 = tpu.iota {dimensions = array<i32: 0>} : vector<8x1xi32>
      %14 = vector.broadcast %12 : i32 to vector<8x1xi32>
      %15 = arith.addi %14, %13 : vector<8x1xi32>
      %c8_i32_6 = arith.constant 8 : i32
      %16 = vector.broadcast %c8_i32_6 : i32 to vector<8x1xi32>
      %17 = arith.cmpi slt, %15, %16 : vector<8x1xi32>
      %cst = arith.constant 0.000000e+00 : f32
      %18 = vector.shape_cast %17 : vector<8x1xi1> to vector<8x1xi1>
      %19 = vector.broadcast %18 : vector<8x1xi1> to vector<8x128xi1>
      %20 = vector.broadcast %cst : f32 to vector<8x128xf32>
      %21 = arith.select %19, %11, %20 : vector<8x128xi1>, vector<8x128xf32>
      %22 = arith.mulf %21, %21 : vector<8x128xf32>
      %cst_7 = arith.constant dense<0.000000e+00> : vector<8xf32>
      %23 = vector.multi_reduction <add>, %22, %cst_7 [1] : vector<8x128xf32> to vector<8xf32>
      %24 = vector.shape_cast %23 : vector<8xf32> to vector<8x1xf32>
      %cst_8 = arith.constant 1.000000e-24 : f32
      %25 = vector.broadcast %cst_8 : f32 to vector<8x1xf32>
      %26 = arith.maximumf %24, %25 : vector<8x1xf32>
      %27 = math.rsqrt %26 : vector<8x1xf32>
      %28 = vector.broadcast %27 : vector<8x1xf32> to vector<8x128xf32>
      %29 = arith.mulf %21, %28 : vector<8x128xf32>
      %c0_9 = arith.constant 0 : index
      %c0_10 = arith.constant 0 : index
      %30 = vector.load %arg4[%c0_9, %c0_10] : memref<128x128xf32, #tpu.memory_space<vmem>>, vector<128x128xf32>
      %cst_11 = arith.constant dense<0.000000e+00> : vector<128x128xf32>
      %31 = tpu.matmul %29, %29, %cst_11 {dimension_numbers = #tpu.dot_dimension_numbers<[0], [0], [1], [1], [0, 1, 1, 1], [], []>} : vector<8x128xf32>, vector<8x128xf32>, vector<128x128xf32> -> vector<128x128xf32>
      %32 = arith.addf %30, %31 : vector<128x128xf32>
      %c0_12 = arith.constant 0 : index
      %c0_13 = arith.constant 0 : index
      %33 = vector.load %arg4[%c0_12, %c0_13] : memref<128x128xf32, #tpu.memory_space<vmem>>, vector<128x128xf32>
      tpu.vector_store %arg4[%c0_12, %c0_13], %32 {strides = array<i32>} : memref<128x128xf32, #tpu.memory_space<vmem>>, vector<128x128xf32>,
    } else {
    }
    %c1_i32_3 = arith.constant 1 : i32
    %8 = arith.cmpi slt, %1, %c1_i32_3 : i32
    %9 = arith.extui %8 : i1 to i32
    %c0_i32_4 = arith.constant 0 : i32
    %10 = arith.cmpi ne, %9, %c0_i32_4 : i32
    scf.if %10 {
      %c0 = arith.constant 0 : index
      %c0_5 = arith.constant 0 : index
      %11 = vector.load %arg3[%c0, %c0_5] : memref<8x128xf32, #tpu.memory_space<vmem>>, vector<8x128xf32>
      %c8_i32 = arith.constant 8 : i32
      %12 = arith.muli %1, %c8_i32 : i32
      %13 = tpu.iota {dimensions = array<i32: 0>} : vector<8x1xi32>
      %14 = vector.broadcast %12 : i32 to vector<8x1xi32>
      %15 = arith.addi %14, %13 : vector<8x1xi32>
      %c8_i32_6 = arith.constant 8 : i32
      %16 = vector.broadcast %c8_i32_6 : i32 to vector<8x1xi32>
      %17 = arith.cmpi slt, %15, %16 : vector<8x1xi32>
      %cst = arith.constant 0.000000e+00 : f32
      %18 = vector.shape_cast %17 : vector<8x1xi1> to vector<8x1xi1>
      %19 = vector.broadcast %18 : vector<8x1xi1> to vector<8x128xi1>
      %20 = vector.broadcast %cst : f32 to vector<8x128xf32>
      %21 = arith.select %19, %11, %20 : vector<8x128xi1>, vector<8x128xf32>
      %22 = arith.mulf %21, %21 : vector<8x128xf32>
      %cst_7 = arith.constant dense<0.000000e+00> : vector<8xf32>
      %23 = vector.multi_reduction <add>, %22, %cst_7 [1] : vector<8x128xf32> to vector<8xf32>
      %24 = vector.shape_cast %23 : vector<8xf32> to vector<8x1xf32>
      %cst_8 = arith.constant 1.000000e-24 : f32
      %25 = vector.broadcast %cst_8 : f32 to vector<8x1xf32>
      %26 = arith.maximumf %24, %25 : vector<8x1xf32>
      %27 = math.rsqrt %26 : vector<8x1xf32>
      %28 = vector.broadcast %27 : vector<8x1xf32> to vector<8x128xf32>
      %29 = arith.mulf %21, %28 : vector<8x128xf32>
      %c0_9 = arith.constant 0 : index
      %c0_10 = arith.constant 0 : index
      %30 = vector.load %arg5[%c0_9, %c0_10] : memref<128x128xf32, #tpu.memory_space<vmem>>, vector<128x128xf32>
      %cst_11 = arith.constant dense<0.000000e+00> : vector<128x128xf32>
      %31 = tpu.matmul %29, %29, %cst_11 {dimension_numbers = #tpu.dot_dimension_numbers<[0], [0], [1], [1], [0, 1, 1, 1], [], []>} : vector<8x128xf32>, vector<8x128xf32>, vector<128x128xf32> -> vector<128x128xf32>
      %32 = arith.addf %30, %31 : vector<128x128xf32>
      %c0_12 = arith.constant 0 : index
      %c0_13 = arith.constant 0 : index
      %33 = vector.load %arg5[%c0_12, %c0_13] : memref<128x128xf32, #tpu.memory_space<vmem>>, vector<128x128xf32>
      tpu.vector_store %arg5[%c0_12, %c0_13], %32 {strides = array<i32>} : memref<128x128xf32, #tpu.memory_space<vmem>>, vector<128x128xf32>,
    } else {
    }
    return
  }
  func.func @transform_0(%arg0: i32, %arg1: i32) -> (i32, i32) {
    %c1_i32 = arith.constant 1 : i32
    %0 = arith.muli %arg0, %c1_i32 : i32
    %1 = arith.addi %0, %arg1 : i32
    %c0_i32 = arith.constant 0 : i32
    %2 = arith.minsi %1, %c0_i32 : i32
    %c0_i32_0 = arith.constant 0 : i32
    %c0_i32_1 = arith.constant 0 : i32
    return %2, %c0_i32_0 : i32, i32
  }
  func.func @transform_1(%arg0: i32, %arg1: i32) -> (i32, i32) {
    %c1_i32 = arith.constant 1 : i32
    %0 = arith.muli %arg0, %c1_i32 : i32
    %1 = arith.addi %0, %arg1 : i32
    %c0_i32 = arith.constant 0 : i32
    %2 = arith.minsi %1, %c0_i32 : i32
    %c0_i32_0 = arith.constant 0 : i32
    %c0_i32_1 = arith.constant 0 : i32
    return %2, %c0_i32_0 : i32, i32
  }
  func.func @transform_2(%arg0: i32, %arg1: i32) -> (i32, i32) {
    %c0_i32 = arith.constant 0 : i32
    %c0_i32_0 = arith.constant 0 : i32
    return %arg0, %c0_i32 : i32, i32
  }
  func.func @transform_3(%arg0: i32, %arg1: i32) -> (i32, i32) {
    %c0_i32 = arith.constant 0 : i32
    %c0_i32_0 = arith.constant 0 : i32
    return %arg0, %c0_i32 : i32, i32
  }
}

</mosaic_0001>

<llo_original>
// kernel: tpu_custom_call.1
$region0: #{tpu_custom_call.1}
  #allocation0 [shape = 'u32[]', space=smem, size = 0x4, offset = 0x4, fixed_abs, tag = 'smem constant byte address 0x4 - core index']
  #allocation1 [shape = 'u32[72,128]{1,0:T(1,128)}', space=vmem, size = 0x9000, scoped, tag = 'internal scratch']
  %s0 = inlined_call_operand.hbm [shape: f32[8,128], index: 0, kind: input, shape index: {}]
  %s1 = inlined_call_operand.hbm [shape: f32[8,128], index: 1, kind: input, shape index: {}]
  %s2 = inlined_call_operand.hbm [shape: f32[128,128], index: 2, kind: output, shape index: {0}]
  %s3 = inlined_call_operand.hbm [shape: f32[128,128], index: 3, kind: output, shape index: {1}]
  %4 = xla_tuple %s2, %s3
  %s5 = sld [smem:[#allocation0]]
  $region42: #{tpu_custom_call.1} parent=0
    _
  %s7 = ssub.s32 1, %s5
  %s8 = scalar_select 0, %s7, %s5
  $region1: #{tpu_custom_call.1} parent=0
    #allocation2 [shape = 'u8[4096]{0}', space=vmem, size = 0x1000, scoped, tag = 'input window, operand 0, single buffered']
    #allocation3 [shape = 's32[1]{0}', space=sflag, size = 0x4, scoped, tag = 'scoped memory for tpu_custom_call.1']
    #allocation4 [shape = 's32[1]{0}', space=sflag, size = 0x4, scoped, tag = 'scoped memory for tpu_custom_call.1']
    #allocation5 [shape = 'u8[4096]{0}', space=vmem, size = 0x1000, scoped, tag = 'input window, operand 1, single buffered']
    #allocation6 [shape = 's32[1]{0}', space=sflag, size = 0x4, scoped, tag = 'scoped memory for tpu_custom_call.1']
    #allocation7 [shape = 'u8[65536]{0}', space=vmem, size = 0x10000, scoped, tag = 'output window, operand 0, single buffered']
    #allocation8 [shape = 'u8[65536]{0}', space=vmem, size = 0x10000, scoped, tag = 'output window, operand 1, single buffered']
    #allocation9 [shape = 's32[1]{0}', space=sflag, size = 0x4, scoped, tag = 'scoped memory for tpu_custom_call.1']
    %9 = vsyncpa [#allocation3], 0
    %10 = vsyncpa [#allocation6], 0
    %11 = vsyncpa [#allocation4], 0
    %12 = vsyncpa [#allocation9], 0
    // Predicated region
    $region2: #{tpu_custom_call.1} parent=1 // pred_check
      _
    $region3: #{tpu_custom_call.1} parent=1 // pred_check_branch
      %14 = sbr.rel (0) target = $region5
    $region4: #{tpu_custom_call.1} parent=1 // pred_region
      %s15 = sadd.s32 0, 0
      %p16 = scmp.lt.s32.totalorder %s15, 0
      %s17 = scalar_select %p16, %s15, 0
      %19 = vsyncadd [#allocation3], 0
      %s20 = smul.addr %s17, 8
      %s21 = scalar_lea.hbm %s0, %s20
      %s23 = sshll.u32 %s21, 4
      %s24 = int_to_ptr.hbm [resolvable:$true] %s23
      %s25 = sshll.u32 [#allocation2], 4
      %s26 = int_to_ptr.vmem [resolvable:$true] %s25
      %28 = dma.hbm_to_vmem [thread:$0]  %s24, 128, %s26, [#allocation3]
    $region5: #{tpu_custom_call.1} parent=1 // pred_fallthru
      _
    // Predicated region
    $region6: #{tpu_custom_call.1} parent=1 // pred_check
      _
    $region7: #{tpu_custom_call.1} parent=1 // pred_check_branch
      %30 = sbr.rel (0) target = $region9
    $region8: #{tpu_custom_call.1} parent=1 // pred_region
      %s31 = sadd.s32 0, 0
      %p32 = scmp.lt.s32.totalorder %s31, 0
      %s33 = scalar_select %p32, %s31, 0
      %35 = vsyncadd [#allocation6], 0
      %s36 = smul.addr %s33, 8
      %s37 = scalar_lea.hbm %s1, %s36
      %s39 = sshll.u32 %s37, 4
      %s40 = int_to_ptr.hbm [resolvable:$true] %s39
      %s41 = sshll.u32 [#allocation5], 4
      %s42 = int_to_ptr.vmem [resolvable:$true] %s41
      %44 = dma.hbm_to_vmem [thread:$0]  %s40, 128, %s42, [#allocation6]
    $region9: #{tpu_custom_call.1} parent=1 // pred_fallthru
      _
    // Predicated region
    $region10: #{tpu_custom_call.1} parent=1 // pred_check
      _
    $region11: #{tpu_custom_call.1} parent=1 // pred_check_branch
      %46 = sbr.rel (0) target = $region13
    $region12: #{tpu_custom_call.1} parent=1 // pred_region
      %48 = dma.done [#allocation3], 128
    $region13: #{tpu_custom_call.1} parent=1 // pred_fallthru
      _
    // Predicated region
    $region14: #{tpu_custom_call.1} parent=1 // pred_check
      _
    $region15: #{tpu_custom_call.1} parent=1 // pred_check_branch
      %50 = sbr.rel (0) target = $region17
    $region16: #{tpu_custom_call.1} parent=1 // pred_region
      %52 = dma.done [#allocation6], 128
    $region17: #{tpu_custom_call.1} parent=1 // pred_fallthru
      _
    %s53 = sadd.s32 0, 0
    %p54 = scmp.lt.s32.totalorder %s53, 0
    %s55 = scalar_select %p54, %s53, 0
    %s56 = sadd.s32 0, 0
    %p57 = scmp.lt.s32.totalorder %s56, 0
    %s58 = scalar_select %p57, %s56, 0
    %s59 = sadd.s32 0, 0
    %p60 = scmp.eq.s32.totalorder 0, 0
    // Predicated region
    $region18: #{tpu_custom_call.1} parent=1 // pred_check
      %p61 = pneg %p60
    $region19: #{tpu_custom_call.1} parent=1 // pred_check_branch
      %63 = sbr.rel (%p61) target = $region21
    $region20: #{tpu_custom_call.1} parent=1 // pred_region
      %64 = vst [vmem:[#allocation7] sm:$0xff] 0.0
      %65 = vst [vmem:[#allocation7 + $0x8] sm:$0xff] 0.0
      %66 = vst [vmem:[#allocation7 + $0x10] sm:$0xff] 0.0
      %67 = vst [vmem:[#allocation7 + $0x18] sm:$0xff] 0.0
      %68 = vst [vmem:[#allocation7 + $0x20] sm:$0xff] 0.0
      %69 = vst [vmem:[#allocation7 + $0x28] sm:$0xff] 0.0
      %70 = vst [vmem:[#allocation7 + $0x30] sm:$0xff] 0.0
      %71 = vst [vmem:[#allocation7 + $0x38] sm:$0xff] 0.0
      %72 = vst [vmem:[#allocation7 + $0x40] sm:$0xff] 0.0
      %73 = vst [vmem:[#allocation7 + $0x48] sm:$0xff] 0.0
      %74 = vst [vmem:[#allocation7 + $0x50] sm:$0xff] 0.0
      %75 = vst [vmem:[#allocation7 + $0x58] sm:$0xff] 0.0
      %76 = vst [vmem:[#allocation7 + $0x60] sm:$0xff] 0.0
      %77 = vst [vmem:[#allocation7 + $0x68] sm:$0xff] 0.0
      %78 = vst [vmem:[#allocation7 + $0x70] sm:$0xff] 0.0
      %79 = vst [vmem:[#allocation7 + $0x78] sm:$0xff] 0.0
      %80 = vst [vmem:[#allocation8] sm:$0xff] 0.0
      %81 = vst [vmem:[#allocation8 + $0x8] sm:$0xff] 0.0
      %82 = vst [vmem:[#allocation8 + $0x10] sm:$0xff] 0.0
      %83 = vst [vmem:[#allocation8 + $0x18] sm:$0xff] 0.0
      %84 = vst [vmem:[#allocation8 + $0x20] sm:$0xff] 0.0
      %85 = vst [vmem:[#allocation8 + $0x28] sm:$0xff] 0.0
      %86 = vst [vmem:[#allocation8 + $0x30] sm:$0xff] 0.0
      %87 = vst [vmem:[#allocation8 + $0x38] sm:$0xff] 0.0
      %88 = vst [vmem:[#allocation8 + $0x40] sm:$0xff] 0.0
      %89 = vst [vmem:[#allocation8 + $0x48] sm:$0xff] 0.0
      %90 = vst [vmem:[#allocation8 + $0x50] sm:$0xff] 0.0
      %91 = vst [vmem:[#allocation8 + $0x58] sm:$0xff] 0.0
      %92 = vst [vmem:[#allocation8 + $0x60] sm:$0xff] 0.0
      %93 = vst [vmem:[#allocation8 + $0x68] sm:$0xff] 0.0
      %94 = vst [vmem:[#allocation8 + $0x70] sm:$0xff] 0.0
      %95 = vst [vmem:[#allocation8 + $0x78] sm:$0xff] 0.0
    $region21: #{tpu_custom_call.1} parent=1 // pred_fallthru
      _
    %p96 = scmp.lt.s32.totalorder %s59, 1
    // Predicated region
    $region22: #{tpu_custom_call.1} parent=1 // pred_check
      %p97 = pneg %p96
    $region23: #{tpu_custom_call.1} parent=1 // pred_check_branch
      %99 = sbr.rel (%p97) target = $region25
    $region24: #{tpu_custom_call.1} parent=1 // pred_region
      %v100 = vld [vmem:[#allocation2] sm:$0xff]
      %s101 = smul.u32 %s59, 8
      %v102 = vlaneseq
      %v103 = vshrl.u32 %v102, 7
      %v104 = vstv %s101
      %v105 = vadd.s32 %v104, %v103
      %vm106 = vcmp.lt.s32.totalorder %v105, 8
      %v107 = vsel %vm106, 1, 0
      %vm108 = vcmp.eq.s32.totalorder %v107, 1
      %v109 = vsel %vm108, %v100, 0.0
      %v110 = vmul.f32 %v109, %v109
      %111 = vadd.xlane.f32.xlu0 %v110
      %v112 = vpop.xlane.xlu0 %111
      %v113 = vmax.f32 %v112, 1e-24
      %v114 = vrsqrt.pop %v113
      %v115 = vmul.f32 %v114, %v113
      %v116 = vmul.f32 %v115, %v114
      %v117 = vmul.f32 0.5, %v116
      %v118 = vsub.f32 1.5, %v117
      %v119 = vmul.f32 %v114, %v118
      %vm120 = vweird.f32 %v113
      %vm121 = vweird.f32 %v114
      %vm122 = vmor %vm120, %vm121
      %v123 = vsel %vm122, %v114, %v119
      %v124 = vmul.f32 %v109, %v123
      %v125 = vld [vmem:[#allocation7] sm:$0xff]
      %v126 = vld [vmem:[#allocation7 + $0x8] sm:$0xff]
      %v127 = vld [vmem:[#allocation7 + $0x10] sm:$0xff]
      %v128 = vld [vmem:[#allocation7 + $0x18] sm:$0xff]
      %v129 = vld [vmem:[#allocation7 + $0x20] sm:$0xff]
      %v130 = vld [vmem:[#allocation7 + $0x28] sm:$0xff]
      %v131 = vld [vmem:[#allocation7 + $0x30] sm:$0xff]
      %v132 = vld [vmem:[#allocation7 + $0x38] sm:$0xff]
      %v133 = vld [vmem:[#allocation7 + $0x40] sm:$0xff]
      %v134 = vld [vmem:[#allocation7 + $0x48] sm:$0xff]
      %v135 = vld [vmem:[#allocation7 + $0x50] sm:$0xff]
      %v136 = vld [vmem:[#allocation7 + $0x58] sm:$0xff]
      %v137 = vld [vmem:[#allocation7 + $0x60] sm:$0xff]
      %v138 = vld [vmem:[#allocation7 + $0x68] sm:$0xff]
      %v139 = vld [vmem:[#allocation7 + $0x70] sm:$0xff]
      %v140 = vld [vmem:[#allocation7 + $0x78] sm:$0xff]
      %141 = vxpose.xlu0.b32.start [1/16] %v124, 128
      %142 = vxpose.xlu0.b32.cont [2/16] 0.0, 128
      %143 = vxpose.xlu0.b32.cont [3/16] 0.0, 128
      %144 = vxpose.xlu0.b32.cont [4/16] 0.0, 128
      %145 = vxpose.xlu0.b32.cont [5/16] 0.0, 128
      %146 = vxpose.xlu0.b32.cont [6/16] 0.0, 128
      %147 = vxpose.xlu0.b32.cont [7/16] 0.0, 128
      %148 = vxpose.xlu0.b32.cont [8/16] 0.0, 128
      %149 = vxpose.xlu0.b32.cont [9/16] 0.0, 128
      %150 = vxpose.xlu0.b32.cont [10/16] 0.0, 128
      %151 = vxpose.xlu0.b32.cont [11/16] 0.0, 128
      %152 = vxpose.xlu0.b32.cont [12/16] 0.0, 128
      %153 = vxpose.xlu0.b32.cont [13/16] 0.0, 128
      %154 = vxpose.xlu0.b32.cont [14/16] 0.0, 128
      %155 = vxpose.xlu0.b32.cont [15/16] 0.0, 128
      %156 = vxpose.xlu0.b32.end [16/16] 0.0, 128
      %v157 = vpop.trf.xlu0
      %v158 = vpop.trf.xlu0
      %v159 = vpop.trf.xlu0
      %v160 = vpop.trf.xlu0
      %v161 = vpop.trf.xlu0
      %v162 = vpop.trf.xlu0
      %v163 = vpop.trf.xlu0
      %v164 = vpop.trf.xlu0
      %v165 = vpop.trf.xlu0
      %v166 = vpop.trf.xlu0
      %v167 = vpop.trf.xlu0
      %v168 = vpop.trf.xlu0
      %v169 = vpop.trf.xlu0
      %v170 = vpop.trf.xlu0
      %v171 = vpop.trf.xlu0
      %v172 = vpop.trf.xlu0
      %vm173 = vcmask 64512
      %v175 = vsel %vm173, %v157, 0
      %v178 = vsel %vm173, %v158, 0
      %v181 = vsel %vm173, %v159, 0
      %v184 = vsel %vm173, %v160, 0
      %v187 = vsel %vm173, %v161, 0
      %v190 = vsel %vm173, %v162, 0
      %v193 = vsel %vm173, %v163, 0
      %v196 = vsel %vm173, %v164, 0
      %v199 = vsel %vm173, %v165, 0
      %v202 = vsel %vm173, %v166, 0
      %v205 = vsel %vm173, %v167, 0
      %v208 = vsel %vm173, %v168, 0
      %v211 = vsel %vm173, %v169, 0
      %v214 = vsel %vm173, %v170, 0
      %v217 = vsel %vm173, %v171, 0
      %v220 = vsel %vm173, %v172, 0
      %222 = vmatpush.msra.mxu0 0.0
      %223 = vmatpush.msra.mxu0 0.0
      %224 = vmatpush.msra.mxu0 0.0
      %225 = vmatpush.msra.mxu0 0.0
      %226 = vmatpush.msra.mxu0 0.0
      %227 = vmatpush.msra.mxu0 0.0
      %228 = vmatpush.msra.mxu0 0.0
      %229 = vmatpush.msra.mxu0 0.0
      %230 = vmatpush.msra.mxu0 0.0
      %231 = vmatpush.msra.mxu0 0.0
      %232 = vmatpush.msra.mxu0 0.0
      %233 = vmatpush.msra.mxu0 0.0
      %234 = vmatpush.msra.mxu0 0.0
      %235 = vmatpush.msra.mxu0 0.0
      %236 = vmatpush.msra.mxu0 0.0
      %237 = vmatpush.msra.mxu0 %v124
      %238 = vmatmul.f32.gmra.mxu0 %v175
      %v239 = vpop.f32.mrf.mxu0
      %v240 = vadd.f32 0.0, %v239
      %241 = vmatmul.f32.gmra.mxu0 %v178
      %v242 = vpop.f32.mrf.mxu0
      %v243 = vadd.f32 0.0, %v242
      %244 = vmatmul.f32.gmra.mxu0 %v181
      %v245 = vpop.f32.mrf.mxu0
      %v246 = vadd.f32 0.0, %v245
      %247 = vmatmul.f32.gmra.mxu0 %v184
      %v248 = vpop.f32.mrf.mxu0
      %v249 = vadd.f32 0.0, %v248
      %250 = vmatmul.f32.gmra.mxu0 %v187
      %v251 = vpop.f32.mrf.mxu0
      %v252 = vadd.f32 0.0, %v251
      %253 = vmatmul.f32.gmra.mxu0 %v190
      %v254 = vpop.f32.mrf.mxu0
      %v255 = vadd.f32 0.0, %v254
      %256 = vmatmul.f32.gmra.mxu0 %v193
      %v257 = vpop.f32.mrf.mxu0
      %v258 = vadd.f32 0.0, %v257
      %259 = vmatmul.f32.gmra.mxu0 %v196
      %v260 = vpop.f32.mrf.mxu0
      %v261 = vadd.f32 0.0, %v260
      %262 = vmatmul.f32.gmra.mxu0 %v199
      %v263 = vpop.f32.mrf.mxu0
      %v264 = vadd.f32 0.0, %v263
      %265 = vmatmul.f32.gmra.mxu0 %v202
      %v266 = vpop.f32.mrf.mxu0
      %v267 = vadd.f32 0.0, %v266
      %268 = vmatmul.f32.gmra.mxu0 %v205
      %v269 = vpop.f32.mrf.mxu0
      %v270 = vadd.f32 0.0, %v269
      %271 = vmatmul.f32.gmra.mxu0 %v208
      %v272 = vpop.f32.mrf.mxu0
      %v273 = vadd.f32 0.0, %v272
      %274 = vmatmul.f32.gmra.mxu0 %v211
      %v275 = vpop.f32.mrf.mxu0
      %v276 = vadd.f32 0.0, %v275
      %277 = vmatmul.f32.gmra.mxu0 %v214
      %v278 = vpop.f32.mrf.mxu0
      %v279 = vadd.f32 0.0, %v278
      %280 = vmatmul.f32.gmra.mxu0 %v217
      %v281 = vpop.f32.mrf.mxu0
      %v282 = vadd.f32 0.0, %v281
      %283 = vmatmul.f32.gmra.mxu0 %v220
      %v284 = vpop.f32.mrf.mxu0
      %v285 = vadd.f32 0.0, %v284
      %286 = vdwg.mxu0
      %v287 = vadd.f32 %v125, %v240
      %v288 = vadd.f32 %v126, %v243
      %v289 = vadd.f32 %v127, %v246
      %v290 = vadd.f32 %v128, %v249
      %v291 = vadd.f32 %v129, %v252
      %v292 = vadd.f32 %v130, %v255
      %v293 = vadd.f32 %v131, %v258
      %v294 = vadd.f32 %v132, %v261
      %v295 = vadd.f32 %v133, %v264
      %v296 = vadd.f32 %v134, %v267
      %v297 = vadd.f32 %v135, %v270
      %v298 = vadd.f32 %v136, %v273
      %v299 = vadd.f32 %v137, %v276
      %v300 = vadd.f32 %v138, %v279
      %v301 = vadd.f32 %v139, %v282
      %v302 = vadd.f32 %v140, %v285
      %303 = vst [vmem:[#allocation7] sm:$0xff] %v287
      %304 = vst [vmem:[#allocation7 + $0x8] sm:$0xff] %v288
      %305 = vst [vmem:[#allocation7 + $0x10] sm:$0xff] %v289
      %306 = vst [vmem:[#allocation7 + $0x18] sm:$0xff] %v290
      %307 = vst [vmem:[#allocation7 + $0x20] sm:$0xff] %v291
      %308 = vst [vmem:[#allocation7 + $0x28] sm:$0xff] %v292
      %309 = vst [vmem:[#allocation7 + $0x30] sm:$0xff] %v293
      %310 = vst [vmem:[#allocation7 + $0x38] sm:$0xff] %v294
      %311 = vst [vmem:[#allocation7 + $0x40] sm:$0xff] %v295
      %312 = vst [vmem:[#allocation7 + $0x48] sm:$0xff] %v296
      %313 = vst [vmem:[#allocation7 + $0x50] sm:$0xff] %v297
      %314 = vst [vmem:[#allocation7 + $0x58] sm:$0xff] %v298
      %315 = vst [vmem:[#allocation7 + $0x60] sm:$0xff] %v299
      %316 = vst [vmem:[#allocation7 + $0x68] sm:$0xff] %v300
      %317 = vst [vmem:[#allocation7 + $0x70] sm:$0xff] %v301
      %318 = vst [vmem:[#allocation7 + $0x78] sm:$0xff] %v302
      %v319 = vld [vmem:[#allocation5] sm:$0xff]
      %v320 = vsel %vm108, %v319, 0.0
      %v321 = vmul.f32 %v320, %v320
      %322 = vadd.xlane.f32.xlu0 %v321
      %v323 = vpop.xlane.xlu0 %322
      %v324 = vmax.f32 %v323, 1e-24
      %v325 = vrsqrt.pop %v324
      %v326 = vmul.f32 %v325, %v324
      %v327 = vmul.f32 %v326, %v325
      %v328 = vmul.f32 0.5, %v327
      %v329 = vsub.f32 1.5, %v328
      %v330 = vmul.f32 %v325, %v329
      %vm331 = vweird.f32 %v324
      %vm332 = vweird.f32 %v325
      %vm333 = vmor %vm331, %vm332
      %v334 = vsel %vm333, %v325, %v330
      %v335 = vmul.f32 %v320, %v334
      %v336 = vld [vmem:[#allocation8] sm:$0xff]
      %v337 = vld [vmem:[#allocation8 + $0x8] sm:$0xff]
      %v338 = vld [vmem:[#allocation8 + $0x10] sm:$0xff]
      %v339 = vld [vmem:[#allocation8 + $0x18] sm:$0xff]
      %v340 = vld [vmem:[#allocation8 + $0x20] sm:$0xff]
      %v341 = vld [vmem:[#allocation8 + $0x28] sm:$0xff]
      %v342 = vld [vmem:[#allocation8 + $0x30] sm:$0xff]
      %v343 = vld [vmem:[#allocation8 + $0x38] sm:$0xff]
      %v344 = vld [vmem:[#allocation8 + $0x40] sm:$0xff]
      %v345 = vld [vmem:[#allocation8 + $0x48] sm:$0xff]
      %v346 = vld [vmem:[#allocation8 + $0x50] sm:$0xff]
      %v347 = vld [vmem:[#allocation8 + $0x58] sm:$0xff]
      %v348 = vld [vmem:[#allocation8 + $0x60] sm:$0xff]
      %v349 = vld [vmem:[#allocation8 + $0x68] sm:$0xff]
      %v350 = vld [vmem:[#allocation8 + $0x70] sm:$0xff]
      %v351 = vld [vmem:[#allocation8 + $0x78] sm:$0xff]
      %352 = vxpose.xlu0.b32.start [1/16] %v335, 128
      %353 = vxpose.xlu0.b32.cont [2/16] 0.0, 128
      %354 = vxpose.xlu0.b32.cont [3/16] 0.0, 128
      %355 = vxpose.xlu0.b32.cont [4/16] 0.0, 128
      %356 = vxpose.xlu0.b32.cont [5/16] 0.0, 128
      %357 = vxpose.xlu0.b32.cont [6/16] 0.0, 128
      %358 = vxpose.xlu0.b32.cont [7/16] 0.0, 128
      %359 = vxpose.xlu0.b32.cont [8/16] 0.0, 128
      %360 = vxpose.xlu0.b32.cont [9/16] 0.0, 128
      %361 = vxpose.xlu0.b32.cont [10/16] 0.0, 128
      %362 = vxpose.xlu0.b32.cont [11/16] 0.0, 128
      %363 = vxpose.xlu0.b32.cont [12/16] 0.0, 128
      %364 = vxpose.xlu0.b32.cont [13/16] 0.0, 128
      %365 = vxpose.xlu0.b32.cont [14/16] 0.0, 128
      %366 = vxpose.xlu0.b32.cont [15/16] 0.0, 128
      %367 = vxpose.xlu0.b32.end [16/16] 0.0, 128
      %v368 = vpop.trf.xlu0
      %v369 = vpop.trf.xlu0
      %v370 = vpop.trf.xlu0
      %v371 = vpop.trf.xlu0
      %v372 = vpop.trf.xlu0
      %v373 = vpop.trf.xlu0
      %v374 = vpop.trf.xlu0
      %v375 = vpop.trf.xlu0
      %v376 = vpop.trf.xlu0
      %v377 = vpop.trf.xlu0
      %v378 = vpop.trf.xlu0
      %v379 = vpop.trf.xlu0
      %v380 = vpop.trf.xlu0
      %v381 = vpop.trf.xlu0
      %v382 = vpop.trf.xlu0
      %v383 = vpop.trf.xlu0
      %v385 = vsel %vm173, %v368, 0
      %v388 = vsel %vm173, %v369, 0
      %v391 = vsel %vm173, %v370, 0
      %v394 = vsel %vm173, %v371, 0
      %v397 = vsel %vm173, %v372, 0
      %v400 = vsel %vm173, %v373, 0
      %v403 = vsel %vm173, %v374, 0
      %v406 = vsel %vm173, %v375, 0
      %v409 = vsel %vm173, %v376, 0
      %v412 = vsel %vm173, %v377, 0
      %v415 = vsel %vm173, %v378, 0
      %v418 = vsel %vm173, %v379, 0
      %v421 = vsel %vm173, %v380, 0
      %v424 = vsel %vm173, %v381, 0
      %v427 = vsel %vm173, %v382, 0
      %v430 = vsel %vm173, %v383, 0
      %432 = vmatpush.msra.mxu0 0.0
      %433 = vmatpush.msra.mxu0 0.0
      %434 = vmatpush.msra.mxu0 0.0
      %435 = vmatpush.msra.mxu0 0.0
      %436 = vmatpush.msra.mxu0 0.0
      %437 = vmatpush.msra.mxu0 0.0
      %438 = vmatpush.msra.mxu0 0.0
      %439 = vmatpush.msra.mxu0 0.0
      %440 = vmatpush.msra.mxu0 0.0
      %441 = vmatpush.msra.mxu0 0.0
      %442 = vmatpush.msra.mxu0 0.0
      %443 = vmatpush.msra.mxu0 0.0
      %444 = vmatpush.msra.mxu0 0.0
      %445 = vmatpush.msra.mxu0 0.0
      %446 = vmatpush.msra.mxu0 0.0
      %447 = vmatpush.msra.mxu0 %v335
      %448 = vmatmul.f32.gmra.mxu0 %v385
      %v449 = vpop.f32.mrf.mxu0
      %v450 = vadd.f32 0.0, %v449
      %451 = vmatmul.f32.gmra.mxu0 %v388
      %v452 = vpop.f32.mrf.mxu0
      %v453 = vadd.f32 0.0, %v452
      %454 = vmatmul.f32.gmra.mxu0 %v391
      %v455 = vpop.f32.mrf.mxu0
      %v456 = vadd.f32 0.0, %v455
      %457 = vmatmul.f32.gmra.mxu0 %v394
      %v458 = vpop.f32.mrf.mxu0
      %v459 = vadd.f32 0.0, %v458
      %460 = vmatmul.f32.gmra.mxu0 %v397
      %v461 = vpop.f32.mrf.mxu0
      %v462 = vadd.f32 0.0, %v461
      %463 = vmatmul.f32.gmra.mxu0 %v400
      %v464 = vpop.f32.mrf.mxu0
      %v465 = vadd.f32 0.0, %v464
      %466 = vmatmul.f32.gmra.mxu0 %v403
      %v467 = vpop.f32.mrf.mxu0
      %v468 = vadd.f32 0.0, %v467
      %469 = vmatmul.f32.gmra.mxu0 %v406
      %v470 = vpop.f32.mrf.mxu0
      %v471 = vadd.f32 0.0, %v470
      %472 = vmatmul.f32.gmra.mxu0 %v409
      %v473 = vpop.f32.mrf.mxu0
      %v474 = vadd.f32 0.0, %v473
      %475 = vmatmul.f32.gmra.mxu0 %v412
      %v476 = vpop.f32.mrf.mxu0
      %v477 = vadd.f32 0.0, %v476
      %478 = vmatmul.f32.gmra.mxu0 %v415
      %v479 = vpop.f32.mrf.mxu0
      %v480 = vadd.f32 0.0, %v479
      %481 = vmatmul.f32.gmra.mxu0 %v418
      %v482 = vpop.f32.mrf.mxu0
      %v483 = vadd.f32 0.0, %v482
      %484 = vmatmul.f32.gmra.mxu0 %v421
      %v485 = vpop.f32.mrf.mxu0
      %v486 = vadd.f32 0.0, %v485
      %487 = vmatmul.f32.gmra.mxu0 %v424
      %v488 = vpop.f32.mrf.mxu0
      %v489 = vadd.f32 0.0, %v488
      %490 = vmatmul.f32.gmra.mxu0 %v427
      %v491 = vpop.f32.mrf.mxu0
      %v492 = vadd.f32 0.0, %v491
      %493 = vmatmul.f32.gmra.mxu0 %v430
      %v494 = vpop.f32.mrf.mxu0
      %v495 = vadd.f32 0.0, %v494
      %496 = vdwg.mxu0
      %v497 = vadd.f32 %v336, %v450
      %v498 = vadd.f32 %v337, %v453
      %v499 = vadd.f32 %v338, %v456
      %v500 = vadd.f32 %v339, %v459
      %v501 = vadd.f32 %v340, %v462
      %v502 = vadd.f32 %v341, %v465
      %v503 = vadd.f32 %v342, %v468
      %v504 = vadd.f32 %v343, %v471
      %v505 = vadd.f32 %v344, %v474
      %v506 = vadd.f32 %v345, %v477
      %v507 = vadd.f32 %v346, %v480
      %v508 = vadd.f32 %v347, %v483
      %v509 = vadd.f32 %v348, %v486
      %v510 = vadd.f32 %v349, %v489
      %v511 = vadd.f32 %v350, %v492
      %v512 = vadd.f32 %v351, %v495
      %513 = vst [vmem:[#allocation8] sm:$0xff] %v497
      %514 = vst [vmem:[#allocation8 + $0x8] sm:$0xff] %v498
      %515 = vst [vmem:[#allocation8 + $0x10] sm:$0xff] %v499
      %516 = vst [vmem:[#allocation8 + $0x18] sm:$0xff] %v500
      %517 = vst [vmem:[#allocation8 + $0x20] sm:$0xff] %v501
      %518 = vst [vmem:[#allocation8 + $0x28] sm:$0xff] %v502
      %519 = vst [vmem:[#allocation8 + $0x30] sm:$0xff] %v503
      %520 = vst [vmem:[#allocation8 + $0x38] sm:$0xff] %v504
      %521 = vst [vmem:[#allocation8 + $0x40] sm:$0xff] %v505
      %522 = vst [vmem:[#allocation8 + $0x48] sm:$0xff] %v506
      %523 = vst [vmem:[#allocation8 + $0x50] sm:$0xff] %v507
      %524 = vst [vmem:[#allocation8 + $0x58] sm:$0xff] %v508
      %525 = vst [vmem:[#allocation8 + $0x60] sm:$0xff] %v509
      %526 = vst [vmem:[#allocation8 + $0x68] sm:$0xff] %v510
      %527 = vst [vmem:[#allocation8 + $0x70] sm:$0xff] %v511
      %528 = vst [vmem:[#allocation8 + $0x78] sm:$0xff] %v512
    $region25: #{tpu_custom_call.1} parent=1 // pred_fallthru
      _
    // Predicated region
    $region26: #{tpu_custom_call.1} parent=1 // pred_check
      _
    $region27: #{tpu_custom_call.1} parent=1 // pred_check_branch
      %530 = sbr.rel (0) target = $region29
    $region28: #{tpu_custom_call.1} parent=1 // pred_region
      %532 = vsyncadd [#allocation4], 0
      %s533 = sshll.u32 [#allocation7], 4
      %s534 = int_to_ptr.vmem [resolvable:$true] %s533
      %s535 = sshll.u32 %s2, 4
      %s536 = int_to_ptr.hbm [resolvable:$true] %s535
      %541 = dma.vmem_to_hbm [thread:$0]  %s534, 2048, %s536, [#allocation4], 128, 128, 8
    $region29: #{tpu_custom_call.1} parent=1 // pred_fallthru
      _
    // Predicated region
    $region30: #{tpu_custom_call.1} parent=1 // pred_check
      _
    $region31: #{tpu_custom_call.1} parent=1 // pred_check_branch
      %543 = sbr.rel (0) target = $region33
    $region32: #{tpu_custom_call.1} parent=1 // pred_region
      %545 = vsyncadd [#allocation9], 0
      %s546 = sshll.u32 [#allocation8], 4
      %s547 = int_to_ptr.vmem [resolvable:$true] %s546
      %s548 = sshll.u32 %s3, 4
      %s549 = int_to_ptr.hbm [resolvable:$true] %s548
      %554 = dma.vmem_to_hbm [thread:$0]  %s547, 2048, %s549, [#allocation9], 128, 128, 8
    $region33: #{tpu_custom_call.1} parent=1 // pred_fallthru
      _
    // Predicated region
    $region34: #{tpu_custom_call.1} parent=1 // pred_check
      _
    $region35: #{tpu_custom_call.1} parent=1 // pred_check_branch
      %556 = sbr.rel (0) target = $region37
    $region36: #{tpu_custom_call.1} parent=1 // pred_region
      %558 = dma.done [#allocation4], 2048
    $region37: #{tpu_custom_call.1} parent=1 // pred_fallthru
      _
    // Predicated region
    $region38: #{tpu_custom_call.1} parent=1 // pred_check
      _
    $region39: #{tpu_custom_call.1} parent=1 // pred_check_branch
      %560 = sbr.rel (0) target = $region41
    $region40: #{tpu_custom_call.1} parent=1 // pred_region
      %562 = dma.done [#allocation9], 2048
    $region41: #{tpu_custom_call.1} parent=1 // pred_fallthru
      _
    %563 = vsyncpa [#allocation3], 1
    %564 = vsyncpa [#allocation6], 1
    %565 = vsyncpa [#allocation4], 1
    %566 = vsyncpa [#allocation9], 1

</llo_original>
